<compile_context>
chip_gen: v5e
topology: v5e:2x2
jax: 0.10.0
libtpu: 0.0.40
codegen_flags: <defaults>
</compile_context>

<pallas_src>
import functools

import jax
import jax.numpy as jnp
from jax.experimental import pallas as pl
from jax.experimental.pallas import tpu as pltpu


def _round_up(x, m):
    return ((x + m - 1) // m) * m


def _binned_embed_kernel(idx_ref, table_ref, out_ref, *, feat_slices, d):
    """One row-tile of the binned embedding.

    idx_ref   : [TM, F]      int32  bin index per row, per feature
    table_ref : [TB_pad, D]  f32    all per-feature tables, 8-row padded, stacked
    out_ref   : [TM, F*D]    f32    concatenated embeddings (lane-dense tile)
    feat_slices : static tuple of (row_offset, padded_rows) per feature
    """
    tm = idx_ref.shape[0]
    idx = idx_ref[...]                                        # [TM, F]
    for f, (off, nbp) in enumerate(feat_slices):              # F is small: static unroll
        g = idx[:, f:f + 1]                                   # [TM, 1]
        cols = jax.lax.broadcasted_iota(jnp.int32, (tm, nbp), 1)
        onehot = (cols == g).astype(table_ref.dtype)          # exact row selector
        sub = table_ref[off:off + nbp, :]                     # static, 8-aligned slice
        emb = jnp.dot(onehot, sub, preferred_element_type=jnp.float32)   # [TM, D]
        out_ref[:, f * d:(f + 1) * d] = emb.astype(out_ref.dtype)


@functools.partial(jax.jit, static_argnames=("feat_slices", "d", "tm"))
def _binned_embedding_fwd(idx, table, *, feat_slices, d, tm):
    n_pad, f = idx.shape
    tb_pad = table.shape[0]
    fd = f * d
    grid = (n_pad // tm,)

    kernel = functools.partial(_binned_embed_kernel, feat_slices=feat_slices, d=d)

    # VMEM budget: double-buffered idx/out blocks + resident table + one-hot scratch.
    # Clamp to [32 MiB, 64 MiB]: above the 16 MiB v5e scoped default, within v7x's
    # 64 MiB physical VMEM.
    max_nbp = max(nbp for _, nbp in feat_slices)
    est = (table.size * 4 + 2 * (tm * f * 4) + 2 * (tm * fd * 4)
           + 2 * (tm * max_nbp * 4) + (1 << 20))
    vmem_limit = int(min(max(est, 32 * 1024 * 1024), 64 * 1024 * 1024))

    return pl.pallas_call(
        kernel,
        out_shape=jax.ShapeDtypeStruct((n_pad, fd), jnp.float32),
        grid_spec=pltpu.PrefetchScalarGridSpec(
            num_scalar_prefetch=0,
            grid=grid,
            in_specs=[
                pl.BlockSpec((tm, f), lambda i: (i, 0)),       # row tile of indices
                pl.BlockSpec((tb_pad, d), lambda i: (0, 0)),   # table: VMEM-resident
            ],
            out_specs=pl.BlockSpec((tm, fd), lambda i: (i, 0)),  # lane-dense [TM, F*D]
        ),
        compiler_params=pltpu.CompilerParams(
            dimension_semantics=("parallel",),
            vmem_limit_bytes=vmem_limit,
        ),
    )(idx, table)


class BinnedEmbedding:
    """JAX/Pallas port of the PyTorch BinnedEmbedding module."""

    def __init__(self, num_bins_list, embedding_dim, key):
        self.num_bins_list = tuple(int(b) for b in num_bins_list)
        self.embedding_dim = int(embedding_dim)
        keys = jax.random.split(key, len(self.num_bins_list))
        # nn.Embedding default init: N(0, 1)
        self.tables = [
            jax.random.normal(k, (nb, self.embedding_dim), dtype=jnp.float32)
            for k, nb in zip(keys, self.num_bins_list)
        ]
        # Pad each table to a multiple of 8 rows (sublane-aligned static slices),
        # stack into one slab; per-feature offsets are static Python ints.
        padded, feat_slices, acc = [], [], 0
        for t in self.tables:
            nbp = _round_up(t.shape[0], 8)
            padded.append(jnp.pad(t, ((0, nbp - t.shape[0]), (0, 0))))
            feat_slices.append((acc, nbp))
            acc += nbp
        self.feat_slices = tuple(feat_slices)
        self.stacked_table = jnp.concatenate(padded, axis=0)   # [TB_pad, D]

    def __call__(self, x_binned, tile_rows=1024):
        # x_binned: [N, F] integer bin indices.
        n, f = x_binned.shape
        assert f == len(self.num_bins_list)
        tm = min(_round_up(max(int(tile_rows), 8), 8), _round_up(n, 8))
        n_pad = _round_up(n, tm)
        idx = x_binned.astype(jnp.int32)
        if n_pad != n:
            idx = jnp.pad(idx, ((0, n_pad - n), (0, 0)))       # pad rows use bin 0
        out = _binned_embedding_fwd(
            idx, self.stacked_table,
            feat_slices=self.feat_slices, d=self.embedding_dim, tm=tm)
        return out[:n]                                          # == torch.cat(rst, -1)

    def reference(self, x_binned):
        """Pure-JAX reference matching the PyTorch forward exactly."""
        parts = [t[x_binned[:, i]] for i, t in enumerate(self.tables)]
        return jnp.concatenate(parts, axis=-1)


if __name__ == "__main__":
    key = jax.random.PRNGKey(0)

    # Same example indices as the PyTorch file.
    x_binned = jnp.array(
        [[1, 4, 2], [0, 3, 1], [2, 5, 0], [1, 1, 1], [0, 2, 2]], dtype=jnp.int32
    )
    num_bins_list = [3, 6, 3]
    embedding_dim = 8

    model = BinnedEmbedding(num_bins_list, embedding_dim, key)
    out = jax.block_until_ready(model(x_binned))
    ref = model.reference(x_binned)
    assert out.shape == (x_binned.shape[0], len(num_bins_list) * embedding_dim)
    assert jnp.allclose(out, ref, atol=1e-6, rtol=1e-6), "mismatch vs reference"

    # Slightly larger case exercising a multi-step (pipelined) row grid.
    k_idx, k_model = jax.random.split(jax.random.PRNGKey(1))
    bins2 = [13, 37, 5, 21]
    x2 = jnp.stack(
        [jax.random.randint(k, (40,), 0, nb, dtype=jnp.int32)
         for k, nb in zip(jax.random.split(k_idx, len(bins2)), bins2)],
        axis=1)
    model2 = BinnedEmbedding(bins2, 8, k_model)
    out2 = jax.block_until_ready(model2(x2, tile_rows=16))      # grid of 3 row tiles
    ref2 = model2.reference(x2)
    assert jnp.allclose(out2, ref2, atol=1e-6, rtol=1e-6), "mismatch vs reference (tiled)"

    print("KERNEL_OK")
</pallas_src>

<mosaic_0001>
module attributes {stable_mosaic.version = 11 : i64} {
  func.func @_binned_embed_kernel(%arg0: i32, %arg1: memref<8x3xi32, #tpu.memory_space<vmem>>, %arg2: memref<24x8xf32, #tpu.memory_space<vmem>>, %arg3: memref<8x24xf32, #tpu.memory_space<vmem>>) attributes {dimension_semantics = [#tpu.dimension_semantics<parallel>], iteration_bounds = array<i64: 1>, scalar_prefetch = 0 : i64, scratch_operands = 0 : i64, tpu.core_type = #tpu.core_type<tc>, window_params = [{transform_indices = @transform_0, window_bounds = array<i64: 8, 3>}, {pipeline_mode = #tpu.pipeline_mode<synchronous>, transform_indices = @transform_1, window_bounds = array<i64: 24, 8>}, {transform_indices = @transform_2, window_bounds = array<i64: 8, 24>}]} {
    %c0 = arith.constant 0 : index
    %c0_0 = arith.constant 0 : index
    %0 = vector.load %arg1[%c0, %c0_0] : memref<8x3xi32, #tpu.memory_space<vmem>>, vector<8x3xi32>
    %1 = vector.extract_strided_slice %0 {offsets = [0, 0], sizes = [8, 1], strides = [1, 1]} : vector<8x3xi32> to vector<8x1xi32>
    %2 = tpu.iota {dimensions = array<i32: 1>} : vector<8x8xi32>
    %3 = vector.broadcast %1 : vector<8x1xi32> to vector<8x8xi32>
    %4 = arith.cmpi eq, %2, %3 : vector<8x8xi32>
    %5 = arith.extui %4 : vector<8x8xi1> to vector<8x8xi32>
    %6 = arith.sitofp %5 : vector<8x8xi32> to vector<8x8xf32>
    %c0_1 = arith.constant 0 : index
    %c0_2 = arith.constant 0 : index
    %7 = vector.load %arg2[%c0_1, %c0_2] : memref<24x8xf32, #tpu.memory_space<vmem>>, vector<8x8xf32>
    %cst = arith.constant dense<0.000000e+00> : vector<8x8xf32>
    %8 = tpu.matmul %6, %7, %cst {dimension_numbers = #tpu.dot_dimension_numbers<[1], [0], [0], [1], [0, 0, 1, 1], [], []>} : vector<8x8xf32>, vector<8x8xf32>, vector<8x8xf32> -> vector<8x8xf32>
    %c0_3 = arith.constant 0 : index
    %c0_4 = arith.constant 0 : index
    %9 = vector.load %arg3[%c0_3, %c0_4] : memref<8x24xf32, #tpu.memory_space<vmem>>, vector<8x8xf32>
    tpu.vector_store %arg3[%c0_3, %c0_4], %8 {strides = array<i32>} : memref<8x24xf32, #tpu.memory_space<vmem>>, vector<8x8xf32>,
    %10 = vector.extract_strided_slice %0 {offsets = [0, 1], sizes = [8, 1], strides = [1, 1]} : vector<8x3xi32> to vector<8x1xi32>
    %11 = tpu.iota {dimensions = array<i32: 1>} : vector<8x8xi32>
    %12 = vector.broadcast %10 : vector<8x1xi32> to vector<8x8xi32>
    %13 = arith.cmpi eq, %11, %12 : vector<8x8xi32>
    %14 = arith.extui %13 : vector<8x8xi1> to vector<8x8xi32>
    %15 = arith.sitofp %14 : vector<8x8xi32> to vector<8x8xf32>
    %c8 = arith.constant 8 : index
    %c0_5 = arith.constant 0 : index
    %16 = vector.load %arg2[%c8, %c0_5] : memref<24x8xf32, #tpu.memory_space<vmem>>, vector<8x8xf32>
    %cst_6 = arith.constant dense<0.000000e+00> : vector<8x8xf32>
    %17 = tpu.matmul %15, %16, %cst_6 {dimension_numbers = #tpu.dot_dimension_numbers<[1], [0], [0], [1], [0, 0, 1, 1], [], []>} : vector<8x8xf32>, vector<8x8xf32>, vector<8x8xf32> -> vector<8x8xf32>
    %c0_7 = arith.constant 0 : index
    %c8_8 = arith.constant 8 : index
    %18 = vector.load %arg3[%c0_7, %c8_8] : memref<8x24xf32, #tpu.memory_space<vmem>>, vector<8x8xf32>
    tpu.vector_store %arg3[%c0_7, %c8_8], %17 {strides = array<i32>} : memref<8x24xf32, #tpu.memory_space<vmem>>, vector<8x8xf32>,
    %19 = vector.extract_strided_slice %0 {offsets = [0, 2], sizes = [8, 1], strides = [1, 1]} : vector<8x3xi32> to vector<8x1xi32>
    %20 = tpu.iota {dimensions = array<i32: 1>} : vector<8x8xi32>
    %21 = vector.broadcast %19 : vector<8x1xi32> to vector<8x8xi32>
    %22 = arith.cmpi eq, %20, %21 : vector<8x8xi32>
    %23 = arith.extui %22 : vector<8x8xi1> to vector<8x8xi32>
    %24 = arith.sitofp %23 : vector<8x8xi32> to vector<8x8xf32>
    %c16 = arith.constant 16 : index
    %c0_9 = arith.constant 0 : index
    %25 = vector.load %arg2[%c16, %c0_9] : memref<24x8xf32, #tpu.memory_space<vmem>>, vector<8x8xf32>
    %cst_10 = arith.constant dense<0.000000e+00> : vector<8x8xf32>
    %26 = tpu.matmul %24, %25, %cst_10 {dimension_numbers = #tpu.dot_dimension_numbers<[1], [0], [0], [1], [0, 0, 1, 1], [], []>} : vector<8x8xf32>, vector<8x8xf32>, vector<8x8xf32> -> vector<8x8xf32>
    %c0_11 = arith.constant 0 : index
    %c16_12 = arith.constant 16 : index
    %27 = vector.load %arg3[%c0_11, %c16_12] : memref<8x24xf32, #tpu.memory_space<vmem>>, vector<8x8xf32>
    tpu.vector_store %arg3[%c0_11, %c16_12], %26 {strides = array<i32>} : memref<8x24xf32, #tpu.memory_space<vmem>>, vector<8x8xf32>,
    return
  }
  func.func @transform_0(%arg0: i32) -> (i32, i32) {
    %c0_i32 = arith.constant 0 : i32
    %c0_i32_0 = arith.constant 0 : i32
    return %arg0, %c0_i32 : i32, i32
  }
  func.func @transform_1(%arg0: i32) -> (i32, i32) {
    %c0_i32 = arith.constant 0 : i32
    %c0_i32_0 = arith.constant 0 : i32
    %c0_i32_1 = arith.constant 0 : i32
    return %c0_i32, %c0_i32_0 : i32, i32
  }
  func.func @transform_2(%arg0: i32) -> (i32, i32) {
    %c0_i32 = arith.constant 0 : i32
    %c0_i32_0 = arith.constant 0 : i32
    return %arg0, %c0_i32 : i32, i32
  }
}

</mosaic_0001>

<llo_original>
// kernel: _binned_embedding_fwd.1
$region0: #{_binned_embedding_fwd.1}
  #allocation0 [shape = 'u32[]', space=smem, size = 0x4, offset = 0x4, fixed_abs, tag = 'smem constant byte address 0x4 - core index']
  #allocation1 [shape = 'u32[72,128]{1,0:T(1,128)}', space=vmem, size = 0x9000, scoped, tag = 'internal scratch']
  %s0 = inlined_call_operand.vmem [shape: s32[8,3], index: 0, kind: input, shape index: {}]
  %s1 = inlined_call_operand.vmem [shape: f32[24,8], index: 1, kind: input, shape index: {}]
  %s2 = inlined_call_operand.hbm [shape: f32[8,24], index: 2, kind: output, shape index: {}]
  %s3 = sld [smem:[#allocation0]]
  $region18: #{_binned_embedding_fwd.1} parent=0
    _
  %s5 = ssub.s32 1, %s3
  %s6 = scalar_select 0, %s5, %s3
  $region1: #{_binned_embedding_fwd.1} parent=0
    #allocation2 [shape = 'u8[4096]{0}', space=vmem, size = 0x1000, scoped, tag = 'output window, operand 0, single buffered']
    #allocation3 [shape = 's32[1]{0}', space=sflag, size = 0x4, scoped, tag = 'scoped memory for _binned_embedding_fwd.1']
    %7 = vsyncpa [#allocation3], 0
    // Predicated region
    $region2: #{_binned_embedding_fwd.1} parent=1 // pred_check
      _
    $region3: #{_binned_embedding_fwd.1} parent=1 // pred_check_branch
      %9 = sbr.rel (0) target = $region5
    $region4: #{_binned_embedding_fwd.1} parent=1 // pred_region
      _
    $region5: #{_binned_embedding_fwd.1} parent=1 // pred_fallthru
      _
    // Predicated region
    $region6: #{_binned_embedding_fwd.1} parent=1 // pred_check
      _
    $region7: #{_binned_embedding_fwd.1} parent=1 // pred_check_branch
      %11 = sbr.rel (0) target = $region9
    $region8: #{_binned_embedding_fwd.1} parent=1 // pred_region
      _
    $region9: #{_binned_embedding_fwd.1} parent=1 // pred_fallthru
      _
    %v12 = vld [vmem:[%s0] sm:$0xff]
    %v13 = vlaneseq
    %v14 = vand.u32 %v13, 127
    %15 = vset.pattern.permute.xlu0 0
    %16 = vperm.xlu0 %15, %v12
    %v17 = vpop.permute.xlu0 %16
    %vm18 = vcmp.eq.s32.totalorder %v14, %v17
    %v19 = vsel %vm18, 1, 0
    %v20 = vcvt.s32.f32 %v19
    %v21 = vld [vmem:[%s1] sm:$0xff]
    %vm22 = vcmask 64512
    %v24 = vsel %vm22, %v20, 0
    %26 = vmatpush.msra.mxu0 0.0
    %27 = vmatpush.msra.mxu0 0.0
    %28 = vmatpush.msra.mxu0 0.0
    %29 = vmatpush.msra.mxu0 0.0
    %30 = vmatpush.msra.mxu0 0.0
    %31 = vmatpush.msra.mxu0 0.0
    %32 = vmatpush.msra.mxu0 0.0
    %33 = vmatpush.msra.mxu0 0.0
    %34 = vmatpush.msra.mxu0 0.0
    %35 = vmatpush.msra.mxu0 0.0
    %36 = vmatpush.msra.mxu0 0.0
    %37 = vmatpush.msra.mxu0 0.0
    %38 = vmatpush.msra.mxu0 0.0
    %39 = vmatpush.msra.mxu0 0.0
    %40 = vmatpush.msra.mxu0 0.0
    %41 = vmatpush.msra.mxu0 %v21
    %42 = vmatmul.f32.gmra.mxu0 %v24
    %v43 = vpop.f32.mrf.mxu0
    %v44 = vadd.f32 0.0, %v43
    %45 = vdwg.mxu0
    %46 = vst.msk [vmem:[#allocation2] sm:$0xff] %vm22, %v44
    %47 = vset.pattern.permute.xlu0 1
    %48 = vperm.xlu0 %47, %v12
    %v49 = vpop.permute.xlu0 %48
    %vm50 = vcmp.eq.s32.totalorder %v14, %v49
    %v51 = vsel %vm50, 1, 0
    %v52 = vcvt.s32.f32 %v51
    %v53 = vld [vmem:[%s1 + $0x8] sm:$0xff]
    %v55 = vsel %vm22, %v52, 0
    %57 = vmatpush.msra.mxu0 0.0
    %58 = vmatpush.msra.mxu0 0.0
    %59 = vmatpush.msra.mxu0 0.0
    %60 = vmatpush.msra.mxu0 0.0
    %61 = vmatpush.msra.mxu0 0.0
    %62 = vmatpush.msra.mxu0 0.0
    %63 = vmatpush.msra.mxu0 0.0
    %64 = vmatpush.msra.mxu0 0.0
    %65 = vmatpush.msra.mxu0 0.0
    %66 = vmatpush.msra.mxu0 0.0
    %67 = vmatpush.msra.mxu0 0.0
    %68 = vmatpush.msra.mxu0 0.0
    %69 = vmatpush.msra.mxu0 0.0
    %70 = vmatpush.msra.mxu0 0.0
    %71 = vmatpush.msra.mxu0 0.0
    %72 = vmatpush.msra.mxu0 %v53
    %73 = vmatmul.f32.gmra.mxu0 %v55
    %v74 = vpop.f32.mrf.mxu0
    %v75 = vadd.f32 0.0, %v74
    %76 = vdwg.mxu0
    %78 = vrot.lane.b32.xlu0 %v75, 8
    %v79 = vpop.permute.xlu0 %78
    %vm81 = vcmask 130112
    %82 = vst.msk [vmem:[#allocation2] sm:$0xff] %vm81, %v79
    %83 = vset.pattern.permute.xlu0 2
    %84 = vperm.xlu0 %83, %v12
    %v85 = vpop.permute.xlu0 %84
    %vm86 = vcmp.eq.s32.totalorder %v14, %v85
    %v87 = vsel %vm86, 1, 0
    %v88 = vcvt.s32.f32 %v87
    %v89 = vld [vmem:[%s1 + $0x10] sm:$0xff]
    %v91 = vsel %vm22, %v88, 0
    %93 = vmatpush.msra.mxu0 0.0
    %94 = vmatpush.msra.mxu0 0.0
    %95 = vmatpush.msra.mxu0 0.0
    %96 = vmatpush.msra.mxu0 0.0
    %97 = vmatpush.msra.mxu0 0.0
    %98 = vmatpush.msra.mxu0 0.0
    %99 = vmatpush.msra.mxu0 0.0
    %100 = vmatpush.msra.mxu0 0.0
    %101 = vmatpush.msra.mxu0 0.0
    %102 = vmatpush.msra.mxu0 0.0
    %103 = vmatpush.msra.mxu0 0.0
    %104 = vmatpush.msra.mxu0 0.0
    %105 = vmatpush.msra.mxu0 0.0
    %106 = vmatpush.msra.mxu0 0.0
    %107 = vmatpush.msra.mxu0 0.0
    %108 = vmatpush.msra.mxu0 %v89
    %109 = vmatmul.f32.gmra.mxu0 %v91
    %v110 = vpop.f32.mrf.mxu0
    %v111 = vadd.f32 0.0, %v110
    %112 = vdwg.mxu0
    %114 = vrot.lane.b32.xlu0 %v111, 16
    %v115 = vpop.permute.xlu0 %114
    %vm117 = vcmask 195712
    %118 = vst.msk [vmem:[#allocation2] sm:$0xff] %vm117, %v115
    // Predicated region
    $region10: #{_binned_embedding_fwd.1} parent=1 // pred_check
      _
    $region11: #{_binned_embedding_fwd.1} parent=1 // pred_check_branch
      %120 = sbr.rel (0) target = $region13
    $region12: #{_binned_embedding_fwd.1} parent=1 // pred_region
      %122 = vsyncadd [#allocation3], 0
      %s124 = sshll.u32 [#allocation2], 4
      %s125 = int_to_ptr.vmem [resolvable:$true] %s124
      %s126 = sshll.u32 %s2, 4
      %s127 = int_to_ptr.hbm [resolvable:$true] %s126
      %129 = dma.vmem_to_hbm [thread:$0]  %s125, 128, %s127, [#allocation3]
    $region13: #{_binned_embedding_fwd.1} parent=1 // pred_fallthru
      _
    // Predicated region
    $region14: #{_binned_embedding_fwd.1} parent=1 // pred_check
      _
    $region15: #{_binned_embedding_fwd.1} parent=1 // pred_check_branch
      %131 = sbr.rel (0) target = $region17
    $region16: #{_binned_embedding_fwd.1} parent=1 // pred_region
      %133 = dma.done [#allocation3], 128
    $region17: #{_binned_embedding_fwd.1} parent=1 // pred_fallthru
      _
    %134 = vsyncpa [#allocation3], 1

</llo_original>
